<compile_context>
chip_gen: v5e
topology: v5e:2x2
jax: 0.10.0
libtpu: 0.0.40
codegen_flags: <defaults>
</compile_context>

<pallas_src>
import math

import jax
import jax.numpy as jnp
from jax.experimental import pallas as pl
from jax.experimental.pallas import tpu as pltpu


# ---------------------------------------------------------------------------
# VMEM budget helper
# ---------------------------------------------------------------------------
def _vmem_capacity_bytes():
    try:
        return int(pltpu.get_tpu_info().vmem_capacity_bytes)
    except Exception:
        return 64 << 20  # conservative fallback (v7x-sized)


# ---------------------------------------------------------------------------
# Kernel 1: 1x1 conv as a transposed ("NT") matmul per token tile
#   out[b, n, l] = sum_c w[n, c] * x[b, l, c] + bias[n]
# ---------------------------------------------------------------------------
def _conv1x1_kernel(x_ref, w_ref, b_ref, o_ref):
    # w_ref: (Npad, C) bf16, x_ref: (1, TL, C) bf16 -> (Npad, TL) f32 accum.
    cvt = jax.lax.dot_general(
        w_ref[...],
        x_ref[0],
        dimension_numbers=(((1,), (1,)), ((), ())),
        preferred_element_type=jnp.float32,
    )
    n_real = o_ref.shape[1]                                  # unpadded classes
    o_ref[0] = (cvt[:n_real, :] + b_ref[...]).astype(o_ref.dtype)


def _pick_token_tile(L, C, Npad, N, budget, out_bytes, prefer_split=False):
    """Token-tile length: full row if it fits the VMEM budget, otherwise the
    largest multiple-of-128 divisor of L that fits.  prefer_split forces >=2
    tiles (keeps both v7x TensorCores busy when B == 1)."""
    def need(t):
        return (2 * t * C * 2            # x block (bf16, double-buffered)
                + 2 * Npad * C * 2       # resident weight
                + 2 * N * t * out_bytes  # output block
                + Npad * t * 4)          # f32 MXU result

    div128 = sorted((t for t in range(128, L, 128) if L % t == 0), reverse=True)
    if prefer_split:
        for t in div128:
            if need(t) <= budget:
                return t
    if need(L) <= budget:
        return L
    for t in div128:
        if need(t) <= budget:
            return t
    # TODO(synk): no legal tile fits the budget; fall back to the full row.
    return L


def conv1x1_transposed(x_bf, w_pad, bias_col, TL, vmem_limit):
    """x_bf: (B, L, C) bf16; w_pad: (Npad, C) bf16; bias_col: (N, 1) f32.
    Returns (B, N, L) bf16."""
    B, L, C = x_bf.shape
    Npad = w_pad.shape[0]
    N = bias_col.shape[0]
    return pl.pallas_call(
        _conv1x1_kernel,
        out_shape=jax.ShapeDtypeStruct((B, N, L), jnp.bfloat16),
        grid=(B, L // TL),
        in_specs=[
            pl.BlockSpec((1, TL, C), lambda b, t: (b, t, 0)),
            pl.BlockSpec((Npad, C), lambda b, t: (0, 0)),    # resident weight
            pl.BlockSpec((N, 1), lambda b, t: (0, 0)),       # resident bias
        ],
        out_specs=pl.BlockSpec((1, N, TL), lambda b, t: (b, 0, t)),
        compiler_params=pltpu.CompilerParams(
            dimension_semantics=("parallel", "parallel"),
            vmem_limit_bytes=vmem_limit),
    )(x_bf, w_pad, bias_col)


# ---------------------------------------------------------------------------
# Kernel 2: separable bilinear resize, G feature maps per grid step
#   out = (block_diag(Rh) @ f2d) @ Rw^T      (two lane-dense 2-D matmuls)
# ---------------------------------------------------------------------------
def _resize_kernel(f_ref, rhbd_ref, rwt_ref, o_ref):
    th = jnp.dot(rhbd_ref[...], f_ref[...],
                 preferred_element_type=jnp.float32)         # (G*img_h, W) f32
    o_ref[...] = jnp.dot(th.astype(jnp.bfloat16), rwt_ref[...],
                         preferred_element_type=jnp.float32).astype(o_ref.dtype)


def _pick_group(n_maps, H, W, img_h, img_w, budget, out_bytes):
    """Divisor g of n_maps with sublane-aligned blocks that fits the VMEM
    budget; prefer g giving >=2 grid programs (v7x dual-TC)."""
    ok = []
    for g in range(1, n_maps + 1):
        if n_maps % g:
            continue
        if (g * H) % 8 or (g * img_h) % 8:
            continue
        need = (2 * g * H * W * 2                 # f2d block (bf16)
                + 2 * (g * img_h) * (g * H) * 2   # resident rh_bd (bf16)
                + 2 * W * img_w * 2               # resident rw_t (bf16)
                + 2 * g * img_h * img_w * out_bytes  # output block
                + g * img_h * W * 4)              # f32 intermediate
        if need <= budget:
            ok.append(g)
    if not ok:
        # TODO(synk): fallback uses the whole array as one block; may exceed
        # VMEM for awkward (H, img_h) that defeat the 8-alignment check.
        return n_maps
    multi = [g for g in ok if n_maps // g >= 2]
    return max(multi) if multi else max(ok)


def bilinear_resize_grouped(f2d, rh_bd, rw_t, G, H, img_h, out_dtype, vmem_limit):
    """f2d: (n_maps*H, W) bf16; rh_bd: (G*img_h, G*H) bf16; rw_t: (W, img_w) bf16."""
    MH, W = f2d.shape
    n_maps = MH // H
    img_w = rw_t.shape[1]
    return pl.pallas_call(
        _resize_kernel,
        out_shape=jax.ShapeDtypeStruct((n_maps * img_h, img_w), out_dtype),
        grid=(n_maps // G,),
        in_specs=[
            pl.BlockSpec((G * H, W), lambda i: (i, 0)),
            pl.BlockSpec((G * img_h, G * H), lambda i: (0, 0)),  # resident
            pl.BlockSpec((W, img_w), lambda i: (0, 0)),          # resident
        ],
        out_specs=pl.BlockSpec((G * img_h, img_w), lambda i: (i, 0)),
        compiler_params=pltpu.CompilerParams(
            dimension_semantics=("parallel",),
            vmem_limit_bytes=vmem_limit),
    )(f2d, rh_bd, rw_t)


# ---------------------------------------------------------------------------
# Host-side helpers (built once; tiny constant matrices)
# ---------------------------------------------------------------------------
def bilinear_matrix(out_size, in_size):
    """Interpolation matrix matching torch F.interpolate(mode='bilinear',
    align_corners=False)."""
    scale = in_size / out_size
    dst = jnp.arange(out_size, dtype=jnp.float32)
    src = jnp.maximum((dst + 0.5) * scale - 0.5, 0.0)
    i0 = jnp.clip(jnp.floor(src).astype(jnp.int32), 0, in_size - 1)
    i1 = jnp.minimum(i0 + 1, in_size - 1)
    lam = src - i0.astype(jnp.float32)
    rows = jnp.arange(out_size)
    R = jnp.zeros((out_size, in_size), jnp.float32)
    R = R.at[rows, i0].add(1.0 - lam)
    R = R.at[rows, i1].add(lam)
    return R


def _block_diag(r, g):
    """(o, i) -> (g*o, g*i) block-diagonal with r repeated g times."""
    o, i = r.shape
    eye = jnp.eye(g, dtype=r.dtype)
    return (eye[:, None, :, None] * r[None, :, None, :]).reshape(g * o, g * i)


# ---------------------------------------------------------------------------
# LinearDecoder forward
# ---------------------------------------------------------------------------
def linear_decoder_forward(x, weight_nc, bias_n, img_size,
                           out_dtype=jnp.float32):
    """x: (B, L, C); weight_nc: (N, C); bias_n: (N,).
    Returns (B, N, img_h, img_w) `out_dtype` (NCHW), matching
    Conv2d(1x1) + F.interpolate(mode='bilinear', align_corners=False)."""
    B, L, C = x.shape
    H = int(math.isqrt(L))
    assert H * H == L, f"token count {L} is not a perfect square"
    W = H
    if isinstance(img_size, (tuple, list)):
        img_h, img_w = int(img_size[0]), int(img_size[1])
    else:
        img_h = img_w = int(img_size)
    N = weight_nc.shape[0]
    Npad = ((N + 7) // 8) * 8                  # sublane pad only, not 128

    cap = _vmem_capacity_bytes()
    budget = int(cap * 0.5)                    # block-selection budget
    vmem_limit = int(cap * 0.75)               # scoped-VMEM cap for Mosaic

    # --- stage 1: 1x1 conv, output already channel-major (B, N, L), bf16 ---
    x_bf = x.astype(jnp.bfloat16)
    w_pad = jnp.zeros((Npad, C), jnp.bfloat16).at[:N, :].set(
        weight_nc.astype(jnp.bfloat16))
    bias_col = bias_n.astype(jnp.float32).reshape(N, 1)
    TL = _pick_token_tile(L, C, Npad, N, budget, out_bytes=2,
                          prefer_split=(B == 1))
    feat = conv1x1_transposed(x_bf, w_pad, bias_col, TL, vmem_limit)

    # --- stage 2: separable bilinear resize, G maps per grid step ---
    n_maps = B * N
    out_bytes = jnp.dtype(out_dtype).itemsize
    G = _pick_group(n_maps, H, W, img_h, img_w, budget, out_bytes)
    rh_bd = _block_diag(bilinear_matrix(img_h, H), G).astype(jnp.bfloat16)
    rw_t = jnp.transpose(bilinear_matrix(img_w, W)).astype(jnp.bfloat16)
    f2d = feat.reshape(n_maps * H, W)                         # free reshape
    out2d = bilinear_resize_grouped(f2d, rh_bd, rw_t, G, H, img_h,
                                    out_dtype, vmem_limit)
    return out2d.reshape(B, N, img_h, img_w)                  # free reshape


if __name__ == "__main__":
    # Small shapes: B=2, seq L=16 (H=W=4), in_features C=32, 4 classes, img 16
    B, L, C = 2, 16, 32
    num_classes = 4
    img_size = 16

    key = jax.random.PRNGKey(0)
    kx, kw = jax.random.split(key)
    x = jax.random.normal(kx, (B, L, C), dtype=jnp.float32)

    # Conv2d init per _init_weights: fan_out = 1*1*num_classes,
    # std = sqrt(2/fan_out), bias = 0.
    std = math.sqrt(2.0 / num_classes)
    weight = std * jax.random.normal(kw, (num_classes, C), dtype=jnp.float32)
    bias = jnp.zeros((num_classes,), dtype=jnp.float32)

    out = linear_decoder_forward(x, weight, bias, img_size)
    out = jax.block_until_ready(out)

    # Reference in plain JAX (mirrors the kernel's bf16-rounded conv inputs
    # and bf16 stage-1 intermediate; resize math in f32 HIGHEST).
    H = W = int(math.isqrt(L))
    xf = x.astype(jnp.bfloat16).astype(jnp.float32)
    wf = weight.astype(jnp.bfloat16).astype(jnp.float32)
    conv_ref = jnp.einsum("blc,nc->bln", xf, wf,
                          precision=jax.lax.Precision.HIGHEST) + bias
    feat_ref = jnp.transpose(conv_ref, (0, 2, 1))
    feat_ref = feat_ref.astype(jnp.bfloat16).astype(jnp.float32)
    feat_ref = feat_ref.reshape(B, num_classes, H, W)
    rh = bilinear_matrix(img_size, H)
    rw = bilinear_matrix(img_size, W)
    ref = jnp.einsum("ih,bnhw,jw->bnij", rh, feat_ref, rw,
                     precision=jax.lax.Precision.HIGHEST)

    assert out.shape == (B, num_classes, img_size, img_size)
    max_err = float(jnp.max(jnp.abs(out - ref)))
    assert jnp.allclose(out, ref, atol=1e-1, rtol=2e-2), max_err

    print("KERNEL_OK")
</pallas_src>

<mosaic_0001>
module attributes {stable_mosaic.version = 11 : i64} {
  func.func @_conv1x1_kernel(%arg0: i32, %arg1: i32, %arg2: memref<1x16x32xbf16, #tpu.memory_space<vmem>>, %arg3: memref<8x32xbf16, #tpu.memory_space<vmem>>, %arg4: memref<4x1xf32, #tpu.memory_space<vmem>>, %arg5: memref<1x4x16xbf16, #tpu.memory_space<vmem>>) attributes {dimension_semantics = [#tpu.dimension_semantics<parallel>, #tpu.dimension_semantics<parallel>], iteration_bounds = array<i64: 2, 1>, scalar_prefetch = 0 : i64, scratch_operands = 0 : i64, tpu.core_type = #tpu.core_type<tc>, window_params = [{transform_indices = @transform_0, window_bounds = array<i64: 1, 16, 32>}, {pipeline_mode = #tpu.pipeline_mode<synchronous>, transform_indices = @transform_1, window_bounds = array<i64: 8, 32>}, {pipeline_mode = #tpu.pipeline_mode<synchronous>, transform_indices = @transform_2, window_bounds = array<i64: 4, 1>}, {transform_indices = @transform_3, window_bounds = array<i64: 1, 4, 16>}]} {
    %c0 = arith.constant 0 : index
    %c0_0 = arith.constant 0 : index
    %0 = vector.load %arg3[%c0, %c0_0] : memref<8x32xbf16, #tpu.memory_space<vmem>>, vector<8x32xbf16>
    %c0_1 = arith.constant 0 : index
    %c0_2 = arith.constant 0 : index
    %c0_3 = arith.constant 0 : index
    %1 = vector.load %arg2[%c0_1, %c0_2, %c0_3] : memref<1x16x32xbf16, #tpu.memory_space<vmem>>, vector<1x16x32xbf16>
    %2 = vector.shape_cast %1 : vector<1x16x32xbf16> to vector<16x32xbf16>
    %cst = arith.constant dense<0.000000e+00> : vector<8x16xf32>
    %3 = tpu.matmul %0, %2, %cst {dimension_numbers = #tpu.dot_dimension_numbers<[1], [1], [0], [0], [0, 0, 1, 0], [], []>} : vector<8x32xbf16>, vector<16x32xbf16>, vector<8x16xf32> -> vector<8x16xf32>
    %4 = vector.extract_strided_slice %3 {offsets = [0, 0], sizes = [4, 16], strides = [1, 1]} : vector<8x16xf32> to vector<4x16xf32>
    %c0_4 = arith.constant 0 : index
    %c0_5 = arith.constant 0 : index
    %5 = vector.load %arg4[%c0_4, %c0_5] : memref<4x1xf32, #tpu.memory_space<vmem>>, vector<4x1xf32>
    %6 = vector.broadcast %5 : vector<4x1xf32> to vector<4x16xf32>
    %7 = arith.addf %4, %6 : vector<4x16xf32>
    %8 = arith.truncf %7 : vector<4x16xf32> to vector<4x16xbf16>
    %c0_6 = arith.constant 0 : index
    %c0_7 = arith.constant 0 : index
    %c0_8 = arith.constant 0 : index
    %9 = vector.load %arg5[%c0_6, %c0_7, %c0_8] : memref<1x4x16xbf16, #tpu.memory_space<vmem>>, vector<1x4x16xbf16>
    %10 = vector.shape_cast %9 : vector<1x4x16xbf16> to vector<4x16xbf16>
    %11 = vector.shape_cast %8 : vector<4x16xbf16> to vector<1x4x16xbf16>
    tpu.vector_store %arg5[%c0_6, %c0_7, %c0_8], %11 {strides = array<i32>} : memref<1x4x16xbf16, #tpu.memory_space<vmem>>, vector<1x4x16xbf16>,
    return
  }
  func.func @transform_0(%arg0: i32, %arg1: i32) -> (i32, i32, i32) {
    %c0_i32 = arith.constant 0 : i32
    %c0_i32_0 = arith.constant 0 : i32
    return %arg0, %arg1, %c0_i32 : i32, i32, i32
  }
  func.func @transform_1(%arg0: i32, %arg1: i32) -> (i32, i32) {
    %c0_i32 = arith.constant 0 : i32
    %c0_i32_0 = arith.constant 0 : i32
    %c0_i32_1 = arith.constant 0 : i32
    return %c0_i32, %c0_i32_0 : i32, i32
  }
  func.func @transform_2(%arg0: i32, %arg1: i32) -> (i32, i32) {
    %c0_i32 = arith.constant 0 : i32
    %c0_i32_0 = arith.constant 0 : i32
    %c0_i32_1 = arith.constant 0 : i32
    return %c0_i32, %c0_i32_0 : i32, i32
  }
  func.func @transform_3(%arg0: i32, %arg1: i32) -> (i32, i32, i32) {
    %c0_i32 = arith.constant 0 : i32
    %c0_i32_0 = arith.constant 0 : i32
    return %arg0, %c0_i32, %arg1 : i32, i32, i32
  }
}

</mosaic_0001>

<llo_original>
// kernel: tpu_custom_call.1
$region0: #{tpu_custom_call.1}
  #allocation0 [shape = 'u32[]', space=smem, size = 0x4, offset = 0x4, fixed_abs, tag = 'smem constant byte address 0x4 - core index']
  #allocation1 [shape = 'u32[72,128]{1,0:T(1,128)}', space=vmem, size = 0x9000, scoped, tag = 'internal scratch']
  %s0 = inlined_call_operand.hbm [shape: bf16[2,16,32], index: 0, kind: input, shape index: {}]
  %s1 = inlined_call_operand.vmem [shape: bf16[8,32], index: 1, kind: input, shape index: {}]
  %s2 = inlined_call_operand.vmem [shape: f32[4,1], index: 2, kind: input, shape index: {}]
  %s3 = inlined_call_operand.hbm [shape: bf16[2,4,16], index: 3, kind: output, shape index: {}]
  %s4 = sld [smem:[#allocation0]]
  $region49: #{tpu_custom_call.1} parent=0
    _
  %s6 = ssub.s32 1, %s4
  %s7 = scalar_select 0, %s6, %s4
  $region1: #{tpu_custom_call.1} parent=0
    #allocation2 [shape = 'u8[8192]{0}', space=vmem, size = 0x2000, scoped, tag = 'input window, operand 0']
    #allocation3 [shape = 's32[2]{0}', space=sflag, size = 0x8, scoped, tag = 'scoped memory for tpu_custom_call.1']
    #allocation4 [shape = 's32[2]{0}', space=sflag, size = 0x8, scoped, tag = 'scoped memory for tpu_custom_call.1']
    #allocation5 [shape = 'u8[2048]{0}', space=vmem, size = 0x800, scoped, tag = 'output window, operand 0']
    %8 = vsyncpa [#allocation3], 0
    %s9 = scalar_lea.sflag [#allocation3], 1
    %10 = vsyncpa %s9, 0
    %11 = vsyncpa [#allocation4], 0
    %s12 = scalar_lea.sflag [#allocation4], 1
    %13 = vsyncpa %s12, 0
    loop: start=0, step=1, limit=4
    $region2: #{tpu_custom_call.1} parent=1 // loop_pre_header
      _
    $region3: #{tpu_custom_call.1} parent=1 // loop_header
      %s15 = sphi 0, %s19
      %p16 = scmp.ge.s32.totalorder %s15, 4
      %s22 = sphi 0, %s34
      %s23 = sphi 0, %s30
      %s24 = sphi 0, %s22
      %s25 = sphi 0, %s23
      %s26 = sphi 0, %s24
      %s27 = sphi 0, %s25
      %s39 = sphi 0, %s41
      %s42 = sphi 0, %s39
      %s43 = sphi 0, %s42
      %s59 = sphi 0, %s43
      %s63 = sphi 0, %s63
      %s65 = sphi 0, %s63
      %s66 = sphi 0, %s65
      %s80 = sphi 0, %s66
      %s84 = sphi 0, %s84
      %s86 = sphi 0, %s84
      %s87 = sphi 0, %s86
      %s101 = sphi 0, %s87
      %s109 = sphi 0, %s111
      %s112 = sphi 0, %s109
      %s113 = sphi 0, %s112
      %s129 = sphi 0, %s113
    $region4: #{tpu_custom_call.1} parent=1 // loop_header_branch
      %18 = sbr.rel (%p16) target = $region8
    $region5: #{tpu_custom_call.1} parent=1 // loop_body
      %s20 = ssub.s32 %s15, 1
      %s21 = ssub.s32 %s15, 2
      %s28 = sadd.s32 1, %s23
      %p29 = scmp.ge.s32.totalorder %s28, 1
      %s30 = scalar_select %p29, 0, %s28
      %s31 = sadd.s32 1, %s22
      %s32 = scalar_select %p29, %s31, %s22
      %p33 = scmp.ge.s32.totalorder %s32, 2
      %s34 = scalar_select %p33, 0, %s32
      %s35 = ssub.s32 %s22, %s34
      %s36 = ssub.s32 %s23, %s30
      %s37 = sor.u32 %s35, %s36
      %p38 = scmp.eq.s32.totalorder %s37, 0
      %s40 = sadd.s32 %s39, 1
      %s41 = scalar_select %p38, %s39, %s40
      %p44 = pneg %p38
      %p45 = scmp.eq.s32.totalorder %s15, 1
      %p46 = por %p44, %p45
      %p47 = scmp.ne.s32.totalorder %s39, %s42
      %p48 = scmp.eq.s32.totalorder %s15, 0
      %p49 = por %p47, %p48
      %p50 = scmp.ne.s32.totalorder %s39, %s42
      %p51 = scmp.eq.s32.totalorder %s20, 1
      %p52 = por %p50, %p51
      %p53 = scmp.ne.s32.totalorder %s42, %s43
      %p54 = scmp.eq.s32.totalorder %s20, 0
      %p55 = por %p53, %p54
      %p56 = scmp.ne.s32.totalorder %s42, %s43
      %p57 = scmp.eq.s32.totalorder %s21, 1
      %p58 = por %p56, %p57
      %p60 = scmp.ne.s32.totalorder %s43, %s59
      %p61 = scmp.eq.s32.totalorder %s21, 0
      %p62 = por %p60, %p61
      %s64 = sadd.s32 %s63, 1
      %p67 = scmp.eq.s32.totalorder %s15, 1
      %p68 = scmp.ne.s32.totalorder %s63, %s65
      %p69 = scmp.eq.s32.totalorder %s15, 0
      %p70 = por %p68, %p69
      %p71 = scmp.ne.s32.totalorder %s63, %s65
      %p72 = scmp.eq.s32.totalorder %s20, 1
      %p73 = por %p71, %p72
      %p74 = scmp.ne.s32.totalorder %s65, %s66
      %p75 = scmp.eq.s32.totalorder %s20, 0
      %p76 = por %p74, %p75
      %p77 = scmp.ne.s32.totalorder %s65, %s66
      %p78 = scmp.eq.s32.totalorder %s21, 1
      %p79 = por %p77, %p78
      %p81 = scmp.ne.s32.totalorder %s66, %s80
      %p82 = scmp.eq.s32.totalorder %s21, 0
      %p83 = por %p81, %p82
      %s85 = sadd.s32 %s84, 1
      %p88 = scmp.eq.s32.totalorder %s15, 1
      %p89 = scmp.ne.s32.totalorder %s84, %s86
      %p90 = scmp.eq.s32.totalorder %s15, 0
      %p91 = por %p89, %p90
      %p92 = scmp.ne.s32.totalorder %s84, %s86
      %p93 = scmp.eq.s32.totalorder %s20, 1
      %p94 = por %p92, %p93
      %p95 = scmp.ne.s32.totalorder %s86, %s87
      %p96 = scmp.eq.s32.totalorder %s20, 0
      %p97 = por %p95, %p96
      %p98 = scmp.ne.s32.totalorder %s86, %s87
      %p99 = scmp.eq.s32.totalorder %s21, 1
      %p100 = por %p98, %p99
      %p102 = scmp.ne.s32.totalorder %s87, %s101
      %p103 = scmp.eq.s32.totalorder %s21, 0
      %p104 = por %p102, %p103
      %s105 = ssub.s32 %s22, %s34
      %s106 = ssub.s32 %s23, %s30
      %s107 = sor.u32 %s105, %s106
      %p108 = scmp.eq.s32.totalorder %s107, 0
      %s110 = sadd.s32 %s109, 1
      %s111 = scalar_select %p108, %s109, %s110
      %p114 = pneg %p108
      %p115 = scmp.eq.s32.totalorder %s15, 1
      %p116 = por %p114, %p115
      %p117 = scmp.ne.s32.totalorder %s109, %s112
      %p118 = scmp.eq.s32.totalorder %s15, 0
      %p119 = por %p117, %p118
      %p120 = scmp.ne.s32.totalorder %s109, %s112
      %p121 = scmp.eq.s32.totalorder %s20, 1
      %p122 = por %p120, %p121
      %p123 = scmp.ne.s32.totalorder %s112, %s113
      %p124 = scmp.eq.s32.totalorder %s20, 0
      %p125 = por %p123, %p124
      %p126 = scmp.ne.s32.totalorder %s112, %s113
      %p127 = scmp.eq.s32.totalorder %s21, 1
      %p128 = por %p126, %p127
      %p130 = scmp.ne.s32.totalorder %s113, %s129
      %p131 = scmp.eq.s32.totalorder %s21, 0
      %p132 = por %p130, %p131
      %p133 = scmp.le.s32.totalorder 1, %s15
      %p134 = scmp.lt.s32.totalorder %s15, 3
      %p135 = pnand %p133, %p134
      %p136 = pneg %p135
      // Predicated region
      $region9: #{tpu_custom_call.1} parent=5 // pred_check
        _
      $region10: #{tpu_custom_call.1} parent=5 // pred_check_branch
        %138 = sbr.rel (%p135) target = $region12
      $region11: #{tpu_custom_call.1} parent=5 // pred_region
        %s139 = ssub.s32 %s15, 1
        // Predicated region
        $region13: #{tpu_custom_call.1} parent=11 // pred_check
          %p140 = pneg %p76
        $region14: #{tpu_custom_call.1} parent=11 // pred_check_branch
          %142 = sbr.rel (%p140) target = $region16
        $region15: #{tpu_custom_call.1} parent=11 // pred_region
          _
        $region16: #{tpu_custom_call.1} parent=11 // pred_fallthru
          _
        // Predicated region
        $region17: #{tpu_custom_call.1} parent=11 // pred_check
          %p143 = pneg %p97
        $region18: #{tpu_custom_call.1} parent=11 // pred_check_branch
          %145 = sbr.rel (%p143) target = $region20
        $region19: #{tpu_custom_call.1} parent=11 // pred_region
          _
        $region20: #{tpu_custom_call.1} parent=11 // pred_fallthru
          _
      $region12: #{tpu_custom_call.1} parent=5 // pred_fallthru
        _
      %p146 = scmp.lt.s32.totalorder %s15, 2
      // Predicated region
      $region21: #{tpu_custom_call.1} parent=5 // pred_check
        %p147 = pneg %p146
      $region22: #{tpu_custom_call.1} parent=5 // pred_check_branch
        %149 = sbr.rel (%p147) target = $region24
      $region23: #{tpu_custom_call.1} parent=5 // pred_region
        // Predicated region
        $region25: #{tpu_custom_call.1} parent=23 // pred_check
          %p150 = pneg %p49
        $region26: #{tpu_custom_call.1} parent=23 // pred_check_branch
          %152 = sbr.rel (%p150) target = $region28
        $region27: #{tpu_custom_call.1} parent=23 // pred_region
          %s153 = sand.u32 %s39, 1
          %s154 = scalar_lea.sflag [#allocation3], %s153
          %s155 = sand.u32 %s39, 1
          %s156 = smul.addr %s155, 8
          %s157 = scalar_lea.vmem [#allocation2], %s156
          %s158 = smul.u32 2, %s23
          %160 = vsyncadd %s154, 0
          %s161 = smul.addr %s22, 2
          %s162 = sadd.s32 %s158, %s161
          %s163 = smul.addr %s162, 4
          %s164 = scalar_lea.hbm %s0, %s163
          %s165 = sshll.u32 %s164, 4
          %s166 = int_to_ptr.hbm [resolvable:$true] %s165
          %s167 = sshll.u32 %s157, 4
          %s168 = int_to_ptr.vmem [resolvable:$true] %s167
          %173 = dma.hbm_to_vmem [thread:$0]  %s166, 128, %s168, %s154, 64, 64, 4
        $region28: #{tpu_custom_call.1} parent=23 // pred_fallthru
          _
      $region24: #{tpu_custom_call.1} parent=5 // pred_fallthru
        _
      %p174 = scmp.le.s32.totalorder 1, %s15
      %p175 = scmp.lt.s32.totalorder %s15, 3
      %p176 = pnand %p174, %p175
      %p177 = pneg %p176
      // Predicated region
      $region29: #{tpu_custom_call.1} parent=5 // pred_check
        _
      $region30: #{tpu_custom_call.1} parent=5 // pred_check_branch
        %179 = sbr.rel (%p176) target = $region32
      $region31: #{tpu_custom_call.1} parent=5 // pred_region
        %s180 = ssub.s32 %s15, 1
        %s181 = sand.u32 %s42, 1
        %s182 = scalar_lea.sflag [#allocation3], %s181
        %s183 = sand.u32 %s42, 1
        %s184 = smul.addr %s183, 8
        %s185 = scalar_lea.vmem [#allocation2], %s184
        // Predicated region
        $region33: #{tpu_custom_call.1} parent=31 // pred_check
          %p186 = pneg %p55
        $region34: #{tpu_custom_call.1} parent=31 // pred_check_branch
          %188 = sbr.rel (%p186) target = $region36
        $region35: #{tpu_custom_call.1} parent=31 // pred_region
          %190 = dma.done %s182, 128
        $region36: #{tpu_custom_call.1} parent=31 // pred_fallthru
          _
        %s191 = sand.u32 %s42, 1
        %s192 = scalar_lea.sflag [#allocation3], %s191
        %s193 = sand.u32 %s42, 1
        %s194 = smul.addr %s193, 8
        %s195 = scalar_lea.vmem [#allocation2], %s194
        %p196 = pneg %p55
        %p197 = pneg %p52
        %p198 = pneg %p76
        %p199 = pneg %p73
        %p200 = pneg %p97
        %p201 = pneg %p94
        %p202 = pneg %p125
        %p203 = pneg %p122
        %s204 = sand.u32 %s112, 1
        %s205 = scalar_lea.sflag [#allocation4], %s204
        %s206 = sand.u32 %s112, 1
        %s207 = smul.addr %s206, 2
        %s208 = scalar_lea.vmem [#allocation5], %s207
        %s209 = smul.u32 2, %s25
        %v211 = vld [vmem:[%s1] sm:$0xf]
        %v212 = vld [vmem:[%s185] sm:$0xf]
        %v213 = vld [vmem:[%s185 + $0x4] sm:$0xf]
        %v216 = vunpack.c.l.b16 %v212
        %v217 = vunpack.c.l.b16 %v213
        %v218 = vpack.c.b16 %v217, %v216
        %vm219 = vcmask 261120
        %v221 = vsel %vm219, %v211, 0
        %v224 = vsel %vm219, %v218, 0
        %226 = vmatpush.bf16.xpose.msra.mxu0 0
        %227 = vmatpush.bf16.xpose.msra.mxu0 0
        %228 = vmatpush.bf16.xpose.msra.mxu0 0
        %229 = vmatpush.bf16.xpose.msra.mxu0 0
        %230 = vmatpush.bf16.xpose.msra.mxu0 0
        %231 = vmatpush.bf16.xpose.msra.mxu0 0
        %232 = vmatpush.bf16.xpose.msra.mxu0 0
        %233 = vmatpush.bf16.xpose.msra.mxu0 %v224
        %234 = vmatmul.bf16.gmra.mxu0 %v221
        %v235 = vpop.f32.mrf.mxu0
        %v236 = vadd.f32 0.0, %v235
        %v237 = vpop.f32.mrf.mxu0
        %238 = vdwg.mxu0
        %v239 = vld [vmem:[%s2] sm:$0xf]
        %241 = vset.pattern.permute.xlu0 0
        %242 = vperm.xlu0 %241, %v239
        %v243 = vpop.permute.xlu0 %242
        %v245 = vadd.f32 %v236, %v243
        %v246 = vpack.c.bf16 %v245, %v245
        %vm247 = vcmask 123904
        %248 = vst.msk [vmem:[%s208] sm:$0x3] %vm247, %v246
        %s249 = sand.u32 %s112, 1
        %s250 = scalar_lea.sflag [#allocation4], %s249
        %s251 = sand.u32 %s112, 1
        %s252 = smul.addr %s251, 2
        %s253 = scalar_lea.vmem [#allocation5], %s252
        // Predicated region
        $region37: #{tpu_custom_call.1} parent=31 // pred_check
          %p254 = pneg %p122
        $region38: #{tpu_custom_call.1} parent=31 // pred_check_branch
          %256 = sbr.rel (%p254) target = $region40
        $region39: #{tpu_custom_call.1} parent=31 // pred_region
          %258 = vsyncadd %s250, 0
          %s259 = sadd.s32 %s25, %s24
          %s260 = smul.addr %s259, 2
          %s261 = scalar_lea.hbm %s3, %s260
          %s263 = sshll.u32 %s253, 4
          %s264 = int_to_ptr.vmem [resolvable:$true] %s263
          %s265 = sshll.u32 %s261, 4
          %s266 = int_to_ptr.hbm [resolvable:$true] %s265
          %268 = dma.vmem_to_hbm [thread:$0]  %s264, 32, %s266, %s250
        $region40: #{tpu_custom_call.1} parent=31 // pred_fallthru
          _
      $region32: #{tpu_custom_call.1} parent=5 // pred_fallthru
        _
      %p269 = scmp.le.s32.totalorder 2, %s15
      // Predicated region
      $region41: #{tpu_custom_call.1} parent=5 // pred_check
        %p270 = pneg %p269
      $region42: #{tpu_custom_call.1} parent=5 // pred_check_branch
        %272 = sbr.rel (%p270) target = $region44
      $region43: #{tpu_custom_call.1} parent=5 // pred_region
        %s273 = ssub.s32 %s15, 2
        // Predicated region
        $region45: #{tpu_custom_call.1} parent=43 // pred_check
          %p274 = pneg %p128
        $region46: #{tpu_custom_call.1} parent=43 // pred_check_branch
          %276 = sbr.rel (%p274) target = $region48
        $region47: #{tpu_custom_call.1} parent=43 // pred_region
          %s277 = sand.u32 %s113, 1
          %s278 = scalar_lea.sflag [#allocation4], %s277
          %s279 = sand.u32 %s113, 1
          %s280 = smul.addr %s279, 2
          %s281 = scalar_lea.vmem [#allocation5], %s280
          %283 = dma.done %s278, 32
        $region48: #{tpu_custom_call.1} parent=43 // pred_fallthru
          _
      $region44: #{tpu_custom_call.1} parent=5 // pred_fallthru
        _
    $region6: #{tpu_custom_call.1} parent=1 // loop_footer
      %s19 = sadd.s32 1, %s15
    $region7: #{tpu_custom_call.1} parent=1 // loop_footer_branch
      %14 = sbr.rel target = $region3
    $region8: #{tpu_custom_call.1} parent=1 // loop_exit
      _
    %284 = vsyncpa [#allocation3], 1
    %s285 = scalar_lea.sflag [#allocation3], 1
    %286 = vsyncpa %s285, 1
    %287 = vsyncpa [#allocation4], 1
    %s288 = scalar_lea.sflag [#allocation4], 1
    %289 = vsyncpa %s288, 1

</llo_original>
